<compile_context>
chip_gen: v7x
topology: tpu7x:2x2x1
jax: 0.10.0
libtpu: 0.0.40
codegen_flags: <defaults>
</compile_context>

<pallas_src>
import functools

import jax
import jax.numpy as jnp
from jax.experimental import pallas as pl
from jax.experimental.pallas import tpu as pltpu


# ---------------------------------------------------------------------------
# In-kernel 3x3 "same" conv: im2col taps (lane rolls + halo masks) + one MXU dot.
# ---------------------------------------------------------------------------
def _conv3x3(x, w_ref, b_ref, mask_ref, H, W):
    """x: (R, HW) f32, rows ordered (batch, channel); returns (R, HW) f32.

    w_ref:    (R, 9*R) block-diagonal im2col weight (see _im2col_weight).
    b_ref:    (R, 1) per-row bias column.
    mask_ref: (9, HW) 0/1 zero-padding halo mask, one row per tap.
    """
    R, HW = x.shape
    taps = []
    for ky in range(3):
        for kx in range(3):
            t = ky * 3 + kx
            delta = (ky - 1) * W + (kx - 1)
            # out[p] needs x[p + delta]: cyclic lane roll (XLU slot, ~free);
            # wrapped / out-of-image lanes are zeroed by the precomputed mask.
            shifted = x if delta == 0 else pltpu.roll(x, (-delta) % HW, 1)
            if delta == 0:
                taps.append(shifted)                          # centre tap always valid
            else:
                taps.append(shifted * mask_ref[t:t + 1, :])   # zero the halo lanes
    taps = jnp.concatenate(taps, axis=0)                      # (9*R, HW), sublane-full
    y = jnp.dot(w_ref[...], taps, preferred_element_type=jnp.float32)
    return y + b_ref[...]


# ---------------------------------------------------------------------------
# Call 1: conv1 + BatchNorm batch statistics (shifted one-pass accumulation).
# ---------------------------------------------------------------------------
def _stats_kernel(x_ref, w1_ref, b1_ref, mask_ref, gamma_ref, beta_ref,
                  bn_scale_ref, bn_bias_ref,
                  pivot_ref, s1_ref, s2_ref,
                  *, H, W, C, TB, n_total, eps):
    n = pl.program_id(0)
    last = pl.num_programs(0) - 1

    y1 = _conv3x3(x_ref[...], w1_ref, b1_ref, mask_ref, H, W)   # (TB*C, HW)

    @pl.when(n == 0)
    def _init():
        # Per-channel pivot (~= mean) taken from the first tile; accumulating
        # sums of (y1 - pivot) avoids the catastrophic cancellation of the raw
        # E[y^2] - E[y]^2 formula.
        row_mean = jnp.mean(y1, axis=1, keepdims=True)          # (TB*C, 1)
        ch = row_mean[0:C, :]
        for b in range(1, TB):
            ch = ch + row_mean[b * C:(b + 1) * C, :]
        ch = ch * (1.0 / TB)
        pivot_ref[...] = jnp.concatenate([ch] * TB, axis=0) if TB > 1 else ch
        s1_ref[...] = jnp.zeros_like(s1_ref)
        s2_ref[...] = jnp.zeros_like(s2_ref)
        # Never leave the (resident) output block unwritten.
        bn_scale_ref[...] = jnp.zeros_like(bn_scale_ref)
        bn_bias_ref[...] = jnp.zeros_like(bn_bias_ref)

    d = y1 - pivot_ref[...]
    s1_ref[...] = s1_ref[...] + jnp.sum(d, axis=1, keepdims=True)
    s2_ref[...] = s2_ref[...] + jnp.sum(d * d, axis=1, keepdims=True)

    @pl.when(n == last)
    def _finalize():
        s1 = s1_ref[...]
        s2 = s2_ref[...]
        c1 = s1[0:C, :]
        c2 = s2[0:C, :]
        for b in range(1, TB):
            c1 = c1 + s1[b * C:(b + 1) * C, :]
            c2 = c2 + s2[b * C:(b + 1) * C, :]
        inv_cnt = 1.0 / float(n_total * H * W)
        m1 = c1 * inv_cnt                                       # E[y - pivot]
        mean = pivot_ref[0:C, :] + m1
        var = jnp.maximum(c2 * inv_cnt - m1 * m1, 0.0)          # biased, like torch BN
        scale = gamma_ref[...] * jax.lax.rsqrt(var + eps)
        bn_scale_ref[...] = scale
        bn_bias_ref[...] = beta_ref[...] - mean * scale


# ---------------------------------------------------------------------------
# Call 2: conv1 -> BN+ReLU -> conv2 -> res_scale -> + residual.
# ---------------------------------------------------------------------------
def _emit_kernel(x_ref, w1_ref, b1_ref, w3_ref, b3_ref, mask_ref,
                 bn_scale_ref, bn_bias_ref, out_ref, *, H, W, res_scale):
    x = x_ref[...]
    y1 = _conv3x3(x, w1_ref, b1_ref, mask_ref, H, W)
    z = jnp.maximum(y1 * bn_scale_ref[...] + bn_bias_ref[...], 0.0)   # BN + ReLU fused
    y2 = _conv3x3(z, w3_ref, b3_ref, mask_ref, H, W)
    out_ref[...] = y2 * res_scale + x


# ---------------------------------------------------------------------------
# Wrapper-side parameter / layout preparation.
# ---------------------------------------------------------------------------
def _pick_tile_batch(N, C, HW, max_rows=64, max_tile_bytes=512 * 1024):
    """Largest batch-tile TB whose (TB*C, HW) block is BlockSpec-legal & VMEM-cheap."""
    cands = [tb for tb in range(1, N + 1)
             if N % tb == 0 and ((tb * C) % 8 == 0 or tb == N)]
    fit = [tb for tb in cands
           if tb * C <= max_rows and tb * C * HW * 4 <= max_tile_bytes]
    pool = fit if fit else cands
    full = [tb for tb in pool if (tb * C) % 8 == 0]
    return max(full) if full else max(pool)


def _im2col_weight(w, TB):
    """Torch (C_out, C_in, 3, 3) -> block-diagonal (TB*C_out, 9*TB*C_in) matrix.

    Row b*C_out+co, column t*TB*C_in + b*C_in + ci holds w[co, ci, ky, kx]
    (t = ky*3 + kx), matching the tap stack built in _conv3x3.
    """
    eye = jnp.eye(TB, dtype=jnp.float32)
    return jnp.concatenate(
        [jnp.kron(eye, w[:, :, ky, kx].astype(jnp.float32))
         for ky in range(3) for kx in range(3)], axis=1)


def _tap_masks(H, W):
    """(9, H*W) 0/1 validity mask per conv tap (zero-padding halo)."""
    idx = jnp.arange(H * W, dtype=jnp.int32)
    r, c = idx // W, idx % W
    rows = []
    for ky in range(3):
        for kx in range(3):
            dy, dx = ky - 1, kx - 1
            m = jnp.ones((H * W,), jnp.bool_)
            if dy == -1:
                m = m & (r >= 1)
            if dy == 1:
                m = m & (r <= H - 2)
            if dx == -1:
                m = m & (c >= 1)
            if dx == 1:
                m = m & (c <= W - 2)
            rows.append(m)
    return jnp.stack(rows).astype(jnp.float32)


def _rows(v, TB):
    """Per-channel (C,) / (C,1) vector -> (TB*C, 1) per-row column (batch-major rows)."""
    return jnp.tile(jnp.asarray(v).reshape(-1).astype(jnp.float32), TB).reshape(-1, 1)


def resblock_forward(x_nchw, params, *, res_scale=1.0, eps=1e-5):
    """Pallas ResBlock.forward (stride=1; default is_bn=False branch => BN applied)."""
    N, C, H, W = x_nchw.shape
    HW = H * W
    assert HW % 128 == 0, "H*W must be a multiple of 128 for the lane-dense layout"

    TB = _pick_tile_batch(N, C, HW)      # images per grid step
    R = TB * C                           # sublane rows per tile
    n_tiles = N // TB

    x2 = x_nchw.reshape(N * C, HW).astype(jnp.float32)   # free reshape, no transpose/pad

    w1 = _im2col_weight(params["w1"], TB)
    w3 = _im2col_weight(params["w3"], TB)
    b1 = _rows(params["b1"], TB)
    b3 = _rows(params["b3"], TB)
    gamma = params["gamma"].reshape(C, 1).astype(jnp.float32)
    beta = params["beta"].reshape(C, 1).astype(jnp.float32)
    masks = _tap_masks(H, W)

    def const_spec(arr):
        nd = arr.ndim
        return pl.BlockSpec(arr.shape, lambda n, _nd=nd: (0,) * _nd)

    tile_spec = pl.BlockSpec((R, HW), lambda n: (n, 0))
    vmem_limit = 32 * 1024 * 1024        # safe on v5e/v6e (128 MiB) and v7x (64 MiB)

    # -------- call 1: BN batch statistics (sequential cross-batch reduction) ----
    stats_kernel = functools.partial(_stats_kernel, H=H, W=W, C=C, TB=TB,
                                     n_total=N, eps=float(eps))
    bn_scale, bn_bias = pl.pallas_call(
        stats_kernel,
        out_shape=(jax.ShapeDtypeStruct((C, 1), jnp.float32),
                   jax.ShapeDtypeStruct((C, 1), jnp.float32)),
        grid_spec=pltpu.PrefetchScalarGridSpec(
            num_scalar_prefetch=0,
            grid=(n_tiles,),
            in_specs=[tile_spec, const_spec(w1), const_spec(b1),
                      const_spec(masks), const_spec(gamma), const_spec(beta)],
            out_specs=[pl.BlockSpec((C, 1), lambda n: (0, 0)),
                       pl.BlockSpec((C, 1), lambda n: (0, 0))],
            scratch_shapes=[pltpu.VMEM((R, 1), jnp.float32)] * 3),
        compiler_params=pltpu.CompilerParams(
            dimension_semantics=("arbitrary",),        # reduces into shared scratch
            vmem_limit_bytes=vmem_limit),
    )(x2, w1, b1, masks, gamma, beta)

    scale_rows = _rows(bn_scale, TB)                   # (R, 1), tiny glue
    bias_rows = _rows(bn_bias, TB)

    # -------- call 2: normalize / conv2 / residual, batch axis parallel ---------
    emit_kernel = functools.partial(_emit_kernel, H=H, W=W,
                                    res_scale=float(res_scale))
    out2 = pl.pallas_call(
        emit_kernel,
        out_shape=jax.ShapeDtypeStruct((N * C, HW), jnp.float32),
        grid_spec=pltpu.PrefetchScalarGridSpec(
            num_scalar_prefetch=0,
            grid=(n_tiles,),
            in_specs=[tile_spec, const_spec(w1), const_spec(b1),
                      const_spec(w3), const_spec(b3), const_spec(masks),
                      const_spec(scale_rows), const_spec(bias_rows)],
            out_specs=tile_spec),
        compiler_params=pltpu.CompilerParams(
            dimension_semantics=("parallel",),         # usable by both v7x TCs
            vmem_limit_bytes=vmem_limit),
    )(x2, w1, b1, w3, b3, masks, scale_rows, bias_rows)

    return out2.reshape(N, C, H, W)


# ---------------------------------------------------------------------------
# Pure-JAX reference (correctness check only).
# ---------------------------------------------------------------------------
def _reference(x_nchw, params, res_scale=1.0, eps=1e-5):
    dn = jax.lax.conv_dimension_numbers(x_nchw.shape, params["w1"].shape,
                                        ("NCHW", "OIHW", "NCHW"))
    conv = functools.partial(jax.lax.conv_general_dilated, window_strides=(1, 1),
                             padding="SAME", dimension_numbers=dn,
                             precision=jax.lax.Precision.HIGHEST)
    y = conv(x_nchw, params["w1"]) + params["b1"].reshape(1, -1, 1, 1)
    mean = jnp.mean(y, axis=(0, 2, 3), keepdims=True)
    var = jnp.mean((y - mean) ** 2, axis=(0, 2, 3), keepdims=True)
    z = (y - mean) * jax.lax.rsqrt(var + eps)
    z = jnp.maximum(z * params["gamma"].reshape(1, -1, 1, 1)
                    + params["beta"].reshape(1, -1, 1, 1), 0.0)
    return (conv(z, params["w3"]) + params["b3"].reshape(1, -1, 1, 1)) * res_scale + x_nchw


if __name__ == "__main__":
    N, C, H, W = 2, 4, 16, 16                       # in_channel = out_channel = 4
    key = jax.random.PRNGKey(0)
    k = jax.random.split(key, 7)
    x = jax.random.normal(k[0], (N, C, H, W), jnp.float32)

    # Deterministic synthetic parameters (shapes match nn.Conv2d(C, C, 3) / BatchNorm2d(C)).
    params = dict(
        w1=0.1 * jax.random.normal(k[1], (C, C, 3, 3), jnp.float32),
        b1=0.01 * jax.random.normal(k[2], (C,), jnp.float32),
        gamma=1.0 + 0.1 * jax.random.normal(k[3], (C,), jnp.float32),
        beta=0.05 * jax.random.normal(k[4], (C,), jnp.float32),
        w3=0.1 * jax.random.normal(k[5], (C, C, 3, 3), jnp.float32),
        b3=0.01 * jax.random.normal(k[6], (C,), jnp.float32),
    )

    out = jax.block_until_ready(resblock_forward(x, params, res_scale=1.0))
    ref = _reference(x, params, 1.0)
    assert out.shape == (N, C, H, W)
    err = float(jnp.max(jnp.abs(out - ref)))
    # Tolerance covers possible bf16-pass rounding of the f32 MXU matmuls vs the
    # HIGHEST-precision XLA conv reference; when the Pallas dot runs at full f32
    # precision the observed error is ~1e-5.
    assert bool(jnp.allclose(out, ref, atol=2e-2, rtol=2e-2)), f"max abs err {err}"
    print("KERNEL_OK")
</pallas_src>

<mosaic_0001>
module attributes {stable_mosaic.version = 11 : i64} {
  func.func @_stats_kernel(%arg0: i32, %arg1: memref<8x256xf32, #tpu.memory_space<vmem>>, %arg2: memref<8x72xf32, #tpu.memory_space<vmem>>, %arg3: memref<8x1xf32, #tpu.memory_space<vmem>>, %arg4: memref<9x256xf32, #tpu.memory_space<vmem>>, %arg5: memref<4x1xf32, #tpu.memory_space<vmem>>, %arg6: memref<4x1xf32, #tpu.memory_space<vmem>>, %arg7: memref<4x1xf32, #tpu.memory_space<vmem>>, %arg8: memref<4x1xf32, #tpu.memory_space<vmem>>, %arg9: memref<8x1xf32, #tpu.memory_space<vmem>>, %arg10: memref<8x1xf32, #tpu.memory_space<vmem>>, %arg11: memref<8x1xf32, #tpu.memory_space<vmem>>) attributes {dimension_semantics = [#tpu.dimension_semantics<arbitrary>], iteration_bounds = array<i64: 1>, scalar_prefetch = 0 : i64, scratch_operands = 3 : i64, tpu.core_type = #tpu.core_type<tc>, window_params = [{transform_indices = @transform_0, window_bounds = array<i64: 8, 256>}, {pipeline_mode = #tpu.pipeline_mode<synchronous>, transform_indices = @transform_1, window_bounds = array<i64: 8, 72>}, {pipeline_mode = #tpu.pipeline_mode<synchronous>, transform_indices = @transform_2, window_bounds = array<i64: 8, 1>}, {pipeline_mode = #tpu.pipeline_mode<synchronous>, transform_indices = @transform_3, window_bounds = array<i64: 9, 256>}, {pipeline_mode = #tpu.pipeline_mode<synchronous>, transform_indices = @transform_4, window_bounds = array<i64: 4, 1>}, {pipeline_mode = #tpu.pipeline_mode<synchronous>, transform_indices = @transform_5, window_bounds = array<i64: 4, 1>}, {pipeline_mode = #tpu.pipeline_mode<synchronous>, transform_indices = @transform_6, window_bounds = array<i64: 4, 1>}, {pipeline_mode = #tpu.pipeline_mode<synchronous>, transform_indices = @transform_7, window_bounds = array<i64: 4, 1>}]} {
    %c0 = arith.constant 0 : index
    %c0_0 = arith.constant 0 : index
    %0 = vector.load %arg1[%c0, %c0_0] : memref<8x256xf32, #tpu.memory_space<vmem>>, vector<8x256xf32>
    %c17_i32 = arith.constant 17 : i32
    %1 = tpu.dynamic_rotate %0 by %c17_i32 dim 1 : vector<8x256xf32>, i32 -> vector<8x256xf32>
    %c0_1 = arith.constant 0 : index
    %c0_2 = arith.constant 0 : index
    %2 = vector.load %arg4[%c0_1, %c0_2] : memref<9x256xf32, #tpu.memory_space<vmem>>, vector<1x256xf32>
    %3 = vector.broadcast %2 : vector<1x256xf32> to vector<8x256xf32>
    %4 = arith.mulf %1, %3 : vector<8x256xf32>
    %c16_i32 = arith.constant 16 : i32
    %5 = tpu.dynamic_rotate %0 by %c16_i32 dim 1 : vector<8x256xf32>, i32 -> vector<8x256xf32>
    %c1 = arith.constant 1 : index
    %c0_3 = arith.constant 0 : index
    %6 = vector.load %arg4[%c1, %c0_3] : memref<9x256xf32, #tpu.memory_space<vmem>>, vector<1x256xf32>
    %7 = vector.broadcast %6 : vector<1x256xf32> to vector<8x256xf32>
    %8 = arith.mulf %5, %7 : vector<8x256xf32>
    %c15_i32 = arith.constant 15 : i32
    %9 = tpu.dynamic_rotate %0 by %c15_i32 dim 1 : vector<8x256xf32>, i32 -> vector<8x256xf32>
    %c2 = arith.constant 2 : index
    %c0_4 = arith.constant 0 : index
    %10 = vector.load %arg4[%c2, %c0_4] : memref<9x256xf32, #tpu.memory_space<vmem>>, vector<1x256xf32>
    %11 = vector.broadcast %10 : vector<1x256xf32> to vector<8x256xf32>
    %12 = arith.mulf %9, %11 : vector<8x256xf32>
    %c1_i32 = arith.constant 1 : i32
    %13 = tpu.dynamic_rotate %0 by %c1_i32 dim 1 : vector<8x256xf32>, i32 -> vector<8x256xf32>
    %c3 = arith.constant 3 : index
    %c0_5 = arith.constant 0 : index
    %14 = vector.load %arg4[%c3, %c0_5] : memref<9x256xf32, #tpu.memory_space<vmem>>, vector<1x256xf32>
    %15 = vector.broadcast %14 : vector<1x256xf32> to vector<8x256xf32>
    %16 = arith.mulf %13, %15 : vector<8x256xf32>
    %c255_i32 = arith.constant 255 : i32
    %17 = tpu.dynamic_rotate %0 by %c255_i32 dim 1 : vector<8x256xf32>, i32 -> vector<8x256xf32>
    %c5 = arith.constant 5 : index
    %c0_6 = arith.constant 0 : index
    %18 = vector.load %arg4[%c5, %c0_6] : memref<9x256xf32, #tpu.memory_space<vmem>>, vector<1x256xf32>
    %19 = vector.broadcast %18 : vector<1x256xf32> to vector<8x256xf32>
    %20 = arith.mulf %17, %19 : vector<8x256xf32>
    %c241_i32 = arith.constant 241 : i32
    %21 = tpu.dynamic_rotate %0 by %c241_i32 dim 1 : vector<8x256xf32>, i32 -> vector<8x256xf32>
    %c6 = arith.constant 6 : index
    %c0_7 = arith.constant 0 : index
    %22 = vector.load %arg4[%c6, %c0_7] : memref<9x256xf32, #tpu.memory_space<vmem>>, vector<1x256xf32>
    %23 = vector.broadcast %22 : vector<1x256xf32> to vector<8x256xf32>
    %24 = arith.mulf %21, %23 : vector<8x256xf32>
    %c240_i32 = arith.constant 240 : i32
    %25 = tpu.dynamic_rotate %0 by %c240_i32 dim 1 : vector<8x256xf32>, i32 -> vector<8x256xf32>
    %c7 = arith.constant 7 : index
    %c0_8 = arith.constant 0 : index
    %26 = vector.load %arg4[%c7, %c0_8] : memref<9x256xf32, #tpu.memory_space<vmem>>, vector<1x256xf32>
    %27 = vector.broadcast %26 : vector<1x256xf32> to vector<8x256xf32>
    %28 = arith.mulf %25, %27 : vector<8x256xf32>
    %c239_i32 = arith.constant 239 : i32
    %29 = tpu.dynamic_rotate %0 by %c239_i32 dim 1 : vector<8x256xf32>, i32 -> vector<8x256xf32>
    %c8 = arith.constant 8 : index
    %c0_9 = arith.constant 0 : index
    %30 = vector.load %arg4[%c8, %c0_9] : memref<9x256xf32, #tpu.memory_space<vmem>>, vector<1x256xf32>
    %31 = vector.broadcast %30 : vector<1x256xf32> to vector<8x256xf32>
    %32 = arith.mulf %29, %31 : vector<8x256xf32>
    %33 = tpu.concatenate %4, %8, %12, %16, %0, %20, %24, %28, %32 in 0 : vector<8x256xf32>, vector<8x256xf32>, vector<8x256xf32>, vector<8x256xf32>, vector<8x256xf32>, vector<8x256xf32>, vector<8x256xf32>, vector<8x256xf32>, vector<8x256xf32> -> vector<72x256xf32>
    %c0_10 = arith.constant 0 : index
    %c0_11 = arith.constant 0 : index
    %34 = vector.load %arg2[%c0_10, %c0_11] : memref<8x72xf32, #tpu.memory_space<vmem>>, vector<8x72xf32>
    %cst = arith.constant dense<0.000000e+00> : vector<8x256xf32>
    %35 = tpu.matmul %34, %33, %cst {dimension_numbers = #tpu.dot_dimension_numbers<[1], [0], [0], [1], [0, 0, 1, 1], [], []>} : vector<8x72xf32>, vector<72x256xf32>, vector<8x256xf32> -> vector<8x256xf32>
    %c0_12 = arith.constant 0 : index
    %c0_13 = arith.constant 0 : index
    %36 = vector.load %arg3[%c0_12, %c0_13] : memref<8x1xf32, #tpu.memory_space<vmem>>, vector<8x1xf32>
    %37 = vector.broadcast %36 : vector<8x1xf32> to vector<8x256xf32>
    %38 = arith.addf %35, %37 : vector<8x256xf32>
    %c0_i32 = arith.constant 0 : i32
    %39 = arith.cmpi eq, %arg0, %c0_i32 : i32
    %40 = arith.extui %39 : i1 to i32
    %c0_i32_14 = arith.constant 0 : i32
    %41 = arith.cmpi ne, %40, %c0_i32_14 : i32
    scf.if %41 {
      %cst_29 = arith.constant dense<0.000000e+00> : vector<8xf32>
      %59 = vector.multi_reduction <add>, %38, %cst_29 [1] : vector<8x256xf32> to vector<8xf32>
      %60 = vector.shape_cast %59 : vector<8xf32> to vector<8x1xf32>
      %cst_30 = arith.constant 2.560000e+02 : f32
      %61 = vector.broadcast %cst_30 : f32 to vector<8x1xf32>
      %62 = arith.divf %60, %61 : vector<8x1xf32>
      %63 = vector.extract_strided_slice %62 {offsets = [0, 0], sizes = [4, 1], strides = [1, 1]} : vector<8x1xf32> to vector<4x1xf32>
      %64 = vector.extract_strided_slice %62 {offsets = [4, 0], sizes = [4, 1], strides = [1, 1]} : vector<8x1xf32> to vector<4x1xf32>
      %65 = arith.addf %63, %64 : vector<4x1xf32>
      %cst_31 = arith.constant 5.000000e-01 : f32
      %66 = vector.broadcast %cst_31 : f32 to vector<4x1xf32>
      %67 = arith.mulf %65, %66 : vector<4x1xf32>
      %68 = tpu.concatenate %67, %67 in 0 : vector<4x1xf32>, vector<4x1xf32> -> vector<8x1xf32>
      %c0_32 = arith.constant 0 : index
      %c0_33 = arith.constant 0 : index
      %69 = vector.load %arg9[%c0_32, %c0_33] : memref<8x1xf32, #tpu.memory_space<vmem>>, vector<8x1xf32>
      tpu.vector_store %arg9[%c0_32, %c0_33], %68 {strides = array<i32>} : memref<8x1xf32, #tpu.memory_space<vmem>>, vector<8x1xf32>,
      %cst_34 = arith.constant 0.000000e+00 : f32
      %70 = vector.broadcast %cst_34 : f32 to vector<8x1xf32>
      %c0_35 = arith.constant 0 : index
      %c0_36 = arith.constant 0 : index
      %71 = vector.load %arg10[%c0_35, %c0_36] : memref<8x1xf32, #tpu.memory_space<vmem>>, vector<8x1xf32>
      tpu.vector_store %arg10[%c0_35, %c0_36], %70 {strides = array<i32>} : memref<8x1xf32, #tpu.memory_space<vmem>>, vector<8x1xf32>,
      %cst_37 = arith.constant 0.000000e+00 : f32
      %72 = vector.broadcast %cst_37 : f32 to vector<8x1xf32>
      %c0_38 = arith.constant 0 : index
      %c0_39 = arith.constant 0 : index
      %73 = vector.load %arg11[%c0_38, %c0_39] : memref<8x1xf32, #tpu.memory_space<vmem>>, vector<8x1xf32>
      tpu.vector_store %arg11[%c0_38, %c0_39], %72 {strides = array<i32>} : memref<8x1xf32, #tpu.memory_space<vmem>>, vector<8x1xf32>,
      %cst_40 = arith.constant 0.000000e+00 : f32
      %74 = vector.broadcast %cst_40 : f32 to vector<4x1xf32>
      %c0_41 = arith.constant 0 : index
      %c0_42 = arith.constant 0 : index
      %75 = vector.load %arg7[%c0_41, %c0_42] : memref<4x1xf32, #tpu.memory_space<vmem>>, vector<4x1xf32>
      tpu.vector_store %arg7[%c0_41, %c0_42], %74 {strides = array<i32>} : memref<4x1xf32, #tpu.memory_space<vmem>>, vector<4x1xf32>,
      %cst_43 = arith.constant 0.000000e+00 : f32
      %76 = vector.broadcast %cst_43 : f32 to vector<4x1xf32>
      %c0_44 = arith.constant 0 : index
      %c0_45 = arith.constant 0 : index
      %77 = vector.load %arg8[%c0_44, %c0_45] : memref<4x1xf32, #tpu.memory_space<vmem>>, vector<4x1xf32>
      tpu.vector_store %arg8[%c0_44, %c0_45], %76 {strides = array<i32>} : memref<4x1xf32, #tpu.memory_space<vmem>>, vector<4x1xf32>,
    } else {
    }
    %c0_15 = arith.constant 0 : index
    %c0_16 = arith.constant 0 : index
    %42 = vector.load %arg9[%c0_15, %c0_16] : memref<8x1xf32, #tpu.memory_space<vmem>>, vector<8x1xf32>
    %43 = vector.broadcast %42 : vector<8x1xf32> to vector<8x256xf32>
    %44 = arith.subf %38, %43 : vector<8x256xf32>
    %c0_17 = arith.constant 0 : index
    %c0_18 = arith.constant 0 : index
    %45 = vector.load %arg10[%c0_17, %c0_18] : memref<8x1xf32, #tpu.memory_space<vmem>>, vector<8x1xf32>
    %cst_19 = arith.constant dense<0.000000e+00> : vector<8xf32>
    %46 = vector.multi_reduction <add>, %44, %cst_19 [1] : vector<8x256xf32> to vector<8xf32>
    %47 = vector.shape_cast %46 : vector<8xf32> to vector<8x1xf32>
    %48 = arith.addf %45, %47 : vector<8x1xf32>
    %c0_20 = arith.constant 0 : index
    %c0_21 = arith.constant 0 : index
    %49 = vector.load %arg10[%c0_20, %c0_21] : memref<8x1xf32, #tpu.memory_space<vmem>>, vector<8x1xf32>
    tpu.vector_store %arg10[%c0_20, %c0_21], %48 {strides = array<i32>} : memref<8x1xf32, #tpu.memory_space<vmem>>, vector<8x1xf32>,
    %c0_22 = arith.constant 0 : index
    %c0_23 = arith.constant 0 : index
    %50 = vector.load %arg11[%c0_22, %c0_23] : memref<8x1xf32, #tpu.memory_space<vmem>>, vector<8x1xf32>
    %51 = arith.mulf %44, %44 : vector<8x256xf32>
    %cst_24 = arith.constant dense<0.000000e+00> : vector<8xf32>
    %52 = vector.multi_reduction <add>, %51, %cst_24 [1] : vector<8x256xf32> to vector<8xf32>
    %53 = vector.shape_cast %52 : vector<8xf32> to vector<8x1xf32>
    %54 = arith.addf %50, %53 : vector<8x1xf32>
    %c0_25 = arith.constant 0 : index
    %c0_26 = arith.constant 0 : index
    %55 = vector.load %arg11[%c0_25, %c0_26] : memref<8x1xf32, #tpu.memory_space<vmem>>, vector<8x1xf32>
    tpu.vector_store %arg11[%c0_25, %c0_26], %54 {strides = array<i32>} : memref<8x1xf32, #tpu.memory_space<vmem>>, vector<8x1xf32>,
    %c0_i32_27 = arith.constant 0 : i32
    %56 = arith.cmpi eq, %arg0, %c0_i32_27 : i32
    %57 = arith.extui %56 : i1 to i32
    %c0_i32_28 = arith.constant 0 : i32
    %58 = arith.cmpi ne, %57, %c0_i32_28 : i32
    scf.if %58 {
      %c0_29 = arith.constant 0 : index
      %c0_30 = arith.constant 0 : index
      %59 = vector.load %arg10[%c0_29, %c0_30] : memref<8x1xf32, #tpu.memory_space<vmem>>, vector<8x1xf32>
      %c0_31 = arith.constant 0 : index
      %c0_32 = arith.constant 0 : index
      %60 = vector.load %arg11[%c0_31, %c0_32] : memref<8x1xf32, #tpu.memory_space<vmem>>, vector<8x1xf32>
      %61 = vector.extract_strided_slice %59 {offsets = [0, 0], sizes = [4, 1], strides = [1, 1]} : vector<8x1xf32> to vector<4x1xf32>
      %62 = vector.extract_strided_slice %60 {offsets = [0, 0], sizes = [4, 1], strides = [1, 1]} : vector<8x1xf32> to vector<4x1xf32>
      %63 = vector.extract_strided_slice %59 {offsets = [4, 0], sizes = [4, 1], strides = [1, 1]} : vector<8x1xf32> to vector<4x1xf32>
      %64 = arith.addf %61, %63 : vector<4x1xf32>
      %65 = vector.extract_strided_slice %60 {offsets = [4, 0], sizes = [4, 1], strides = [1, 1]} : vector<8x1xf32> to vector<4x1xf32>
      %66 = arith.addf %62, %65 : vector<4x1xf32>
      %cst_33 = arith.constant 0.001953125 : f32
      %67 = vector.broadcast %cst_33 : f32 to vector<4x1xf32>
      %68 = arith.mulf %64, %67 : vector<4x1xf32>
      %c0_34 = arith.constant 0 : index
      %c0_35 = arith.constant 0 : index
      %69 = vector.load %arg9[%c0_34, %c0_35] : memref<8x1xf32, #tpu.memory_space<vmem>>, vector<4x1xf32>
      %70 = arith.addf %69, %68 : vector<4x1xf32>
      %cst_36 = arith.constant 0.001953125 : f32
      %71 = vector.broadcast %cst_36 : f32 to vector<4x1xf32>
      %72 = arith.mulf %66, %71 : vector<4x1xf32>
      %73 = arith.mulf %68, %68 : vector<4x1xf32>
      %74 = arith.subf %72, %73 : vector<4x1xf32>
      %cst_37 = arith.constant 0.000000e+00 : f32
      %75 = vector.broadcast %cst_37 : f32 to vector<4x1xf32>
      %76 = arith.maximumf %74, %75 : vector<4x1xf32>
      %c0_38 = arith.constant 0 : index
      %c0_39 = arith.constant 0 : index
      %77 = vector.load %arg5[%c0_38, %c0_39] : memref<4x1xf32, #tpu.memory_space<vmem>>, vector<4x1xf32>
      %cst_40 = arith.constant 9.99999974E-6 : f32
      %78 = vector.broadcast %cst_40 : f32 to vector<4x1xf32>
      %79 = arith.addf %76, %78 : vector<4x1xf32>
      %80 = math.rsqrt %79 : vector<4x1xf32>
      %81 = arith.mulf %77, %80 : vector<4x1xf32>
      %c0_41 = arith.constant 0 : index
      %c0_42 = arith.constant 0 : index
      %82 = vector.load %arg7[%c0_41, %c0_42] : memref<4x1xf32, #tpu.memory_space<vmem>>, vector<4x1xf32>
      tpu.vector_store %arg7[%c0_41, %c0_42], %81 {strides = array<i32>} : memref<4x1xf32, #tpu.memory_space<vmem>>, vector<4x1xf32>,
      %c0_43 = arith.constant 0 : index
      %c0_44 = arith.constant 0 : index
      %83 = vector.load %arg6[%c0_43, %c0_44] : memref<4x1xf32, #tpu.memory_space<vmem>>, vector<4x1xf32>
      %84 = arith.mulf %70, %81 : vector<4x1xf32>
      %85 = arith.subf %83, %84 : vector<4x1xf32>
      %c0_45 = arith.constant 0 : index
      %c0_46 = arith.constant 0 : index
      %86 = vector.load %arg8[%c0_45, %c0_46] : memref<4x1xf32, #tpu.memory_space<vmem>>, vector<4x1xf32>
      tpu.vector_store %arg8[%c0_45, %c0_46], %85 {strides = array<i32>} : memref<4x1xf32, #tpu.memory_space<vmem>>, vector<4x1xf32>,
    } else {
    }
    return
  }
  func.func @transform_0(%arg0: i32) -> (i32, i32) {
    %c0_i32 = arith.constant 0 : i32
    %c0_i32_0 = arith.constant 0 : i32
    return %arg0, %c0_i32 : i32, i32
  }
  func.func @transform_1(%arg0: i32) -> (i32, i32) {
    %c0_i32 = arith.constant 0 : i32
    %c0_i32_0 = arith.constant 0 : i32
    %c0_i32_1 = arith.constant 0 : i32
    return %c0_i32, %c0_i32_0 : i32, i32
  }
  func.func @transform_2(%arg0: i32) -> (i32, i32) {
    %c0_i32 = arith.constant 0 : i32
    %c0_i32_0 = arith.constant 0 : i32
    %c0_i32_1 = arith.constant 0 : i32
    return %c0_i32, %c0_i32_0 : i32, i32
  }
  func.func @transform_3(%arg0: i32) -> (i32, i32) {
    %c0_i32 = arith.constant 0 : i32
    %c0_i32_0 = arith.constant 0 : i32
    %c0_i32_1 = arith.constant 0 : i32
    return %c0_i32, %c0_i32_0 : i32, i32
  }
  func.func @transform_4(%arg0: i32) -> (i32, i32) {
    %c0_i32 = arith.constant 0 : i32
    %c0_i32_0 = arith.constant 0 : i32
    %c0_i32_1 = arith.constant 0 : i32
    return %c0_i32, %c0_i32_0 : i32, i32
  }
  func.func @transform_5(%arg0: i32) -> (i32, i32) {
    %c0_i32 = arith.constant 0 : i32
    %c0_i32_0 = arith.constant 0 : i32
    %c0_i32_1 = arith.constant 0 : i32
    return %c0_i32, %c0_i32_0 : i32, i32
  }
  func.func @transform_6(%arg0: i32) -> (i32, i32) {
    %c0_i32 = arith.constant 0 : i32
    %c0_i32_0 = arith.constant 0 : i32
    %c0_i32_1 = arith.constant 0 : i32
    return %c0_i32, %c0_i32_0 : i32, i32
  }
  func.func @transform_7(%arg0: i32) -> (i32, i32) {
    %c0_i32 = arith.constant 0 : i32
    %c0_i32_0 = arith.constant 0 : i32
    %c0_i32_1 = arith.constant 0 : i32
    return %c0_i32, %c0_i32_0 : i32, i32
  }
}

</mosaic_0001>

<llo_original>
// kernel: tpu_custom_call.1
$region0: #{tpu_custom_call.1}
  #allocation0 [shape = 'u32[]', space=smem, size = 0x4, offset = 0x4, fixed_abs, tag = 'smem constant byte address 0x4 - core index']
  #allocation1 [shape = 'u32[144,128]{1,0:T(1,128)}', space=vmem, size = 0x12000, scoped, tag = 'internal scratch']
  #allocation2 [shape = 'f32[8,1]{1,0:T(8,128)}', space=vmem, size = 0x1000, scoped, tag = 'scratch operand']
  #allocation3 [shape = 'f32[8,1]{1,0:T(8,128)}', space=vmem, size = 0x1000, scoped, tag = 'scratch operand']
  #allocation4 [shape = 'f32[8,1]{1,0:T(8,128)}', space=vmem, size = 0x1000, scoped, tag = 'scratch operand']
  %s0 = inlined_call_operand.vmem [shape: f32[8,256], index: 0, kind: input, shape index: {}]
  %s1 = inlined_call_operand.hbm [shape: f32[8,72], index: 1, kind: input, shape index: {}]
  %s2 = inlined_call_operand.vmem [shape: f32[8,1], index: 2, kind: input, shape index: {}]
  %s3 = inlined_call_operand.hbm [shape: f32[9,256], index: 3, kind: input, shape index: {}]
  %s4 = inlined_call_operand.vmem [shape: f32[4,1], index: 4, kind: input, shape index: {}]
  %s5 = inlined_call_operand.vmem [shape: f32[4,1], index: 5, kind: input, shape index: {}]
  %s6 = inlined_call_operand.vmem [shape: f32[4,1], index: 6, kind: output, shape index: {0}]
  %s7 = inlined_call_operand.vmem [shape: f32[4,1], index: 7, kind: output, shape index: {1}]
  %8 = xla_tuple %s6, %s7
  %s9 = sld [smem:[#allocation0]]
  $region58: #{tpu_custom_call.1} parent=0
    _
  %s11 = ssub.s32 1, %s9
  %s12 = scalar_select 0, %s11, %s9
  $region1: #{tpu_custom_call.1} parent=0
    #allocation5 [shape = 'u8[4096]{0}', space=vmem, size = 0x1000, scoped, tag = 'input window, operand 1, single buffered']
    #allocation6 [shape = 's32[1]{0}', space=sflag, size = 0x4, scoped, tag = 'scoped memory for tpu_custom_call.1']
    #allocation7 [shape = 'u8[16384]{0}', space=vmem, size = 0x4000, scoped, tag = 'input window, operand 3, single buffered']
    #allocation8 [shape = 's32[1]{0}', space=sflag, size = 0x4, scoped, tag = 'scoped memory for tpu_custom_call.1']
    %13 = vsyncpa [#allocation6], 0
    %14 = vsyncpa [#allocation8], 0
    // Predicated region
    $region2: #{tpu_custom_call.1} parent=1 // pred_check
      _
    $region3: #{tpu_custom_call.1} parent=1 // pred_check_branch
      %16 = sbr.rel (0) target = $region5
    $region4: #{tpu_custom_call.1} parent=1 // pred_region
      _
    $region5: #{tpu_custom_call.1} parent=1 // pred_fallthru
      _
    // Predicated region
    $region6: #{tpu_custom_call.1} parent=1 // pred_check
      _
    $region7: #{tpu_custom_call.1} parent=1 // pred_check_branch
      %18 = sbr.rel (0) target = $region9
    $region8: #{tpu_custom_call.1} parent=1 // pred_region
      %s20 = ssub.s32 128, 128
      %21 = vsyncadd [#allocation6], %s20
      %s23 = sshll.u32 [#allocation5], 4
      %s24 = int_to_ptr.vmem [resolvable:$true] %s23
      %26 = dma.hbm_to_vmem [thread:$0]  %s1, 128, %s24, [#allocation6]
    $region9: #{tpu_custom_call.1} parent=1 // pred_fallthru
      _
    // Predicated region
    $region10: #{tpu_custom_call.1} parent=1 // pred_check
      _
    $region11: #{tpu_custom_call.1} parent=1 // pred_check_branch
      %28 = sbr.rel (0) target = $region13
    $region12: #{tpu_custom_call.1} parent=1 // pred_region
      _
    $region13: #{tpu_custom_call.1} parent=1 // pred_fallthru
      _
    // Predicated region
    $region14: #{tpu_custom_call.1} parent=1 // pred_check
      _
    $region15: #{tpu_custom_call.1} parent=1 // pred_check_branch
      %30 = sbr.rel (0) target = $region17
    $region16: #{tpu_custom_call.1} parent=1 // pred_region
      %s32 = ssub.s32 512, 512
      %33 = vsyncadd [#allocation8], %s32
      %s34 = sshll.u32 [#allocation7], 4
      %s35 = int_to_ptr.vmem [resolvable:$true] %s34
      %40 = dma.hbm_to_vmem [thread:$0]  %s3, 512, %s35, [#allocation8], 256, 256, 16
    $region17: #{tpu_custom_call.1} parent=1 // pred_fallthru
      _
    // Predicated region
    $region18: #{tpu_custom_call.1} parent=1 // pred_check
      _
    $region19: #{tpu_custom_call.1} parent=1 // pred_check_branch
      %42 = sbr.rel (0) target = $region21
    $region20: #{tpu_custom_call.1} parent=1 // pred_region
      _
    $region21: #{tpu_custom_call.1} parent=1 // pred_fallthru
      _
    // Predicated region
    $region22: #{tpu_custom_call.1} parent=1 // pred_check
      _
    $region23: #{tpu_custom_call.1} parent=1 // pred_check_branch
      %44 = sbr.rel (0) target = $region25
    $region24: #{tpu_custom_call.1} parent=1 // pred_region
      _
    $region25: #{tpu_custom_call.1} parent=1 // pred_fallthru
      _
    // Predicated region
    $region26: #{tpu_custom_call.1} parent=1 // pred_check
      _
    $region27: #{tpu_custom_call.1} parent=1 // pred_check_branch
      %46 = sbr.rel (0) target = $region29
    $region28: #{tpu_custom_call.1} parent=1 // pred_region
      %47 = dma.done [#allocation6], 128
    $region29: #{tpu_custom_call.1} parent=1 // pred_fallthru
      _
    // Predicated region
    $region30: #{tpu_custom_call.1} parent=1 // pred_check
      _
    $region31: #{tpu_custom_call.1} parent=1 // pred_check_branch
      %49 = sbr.rel (0) target = $region33
    $region32: #{tpu_custom_call.1} parent=1 // pred_region
      %50 = dma.done [#allocation8], 512
    $region33: #{tpu_custom_call.1} parent=1 // pred_fallthru
      _
    %v51 = vld [vmem:[%s0] sm:$0xff]
    %v52 = vld [vmem:[%s0 + $0x8] sm:$0xff]
    %53 = vrot.lane.b32.xlu0 %v51, 17
    %v54 = vpop.permute.xlu0 %53
    %55 = vrot.lane.b32.xlu0 %v52, 17
    %v56 = vpop.permute.xlu0 %55
    %v57 = vlaneseq
    %v58 = vand.u32 %v57, 127
    %vm59 = vcmp.lt.s32.totalorder %v58, 17
    %v60 = vsel %vm59, %v54, %v56
    %v61 = vsel %vm59, %v56, %v54
    %v62 = vld [vmem:[#allocation7] ss:$8 sm:$0x3]
    %v64 = vlaneseq
    %v65 = vshrl.u32 %v64, 7
    %v66 = vsub.s32 0, %v65
    %v67 = vrot.slane %v62, %v66
    %v68 = vlaneseq
    %v69 = vshrl.u32 %v68, 7
    %v70 = vsub.s32 1, %v69
    %v71 = vrot.slane %v62, %v70
    %v74 = vmul.f32 %v61, %v67
    %v75 = vmul.f32 %v60, %v71
    %76 = vrot.lane.b32.xlu0 %v51, 16
    %v77 = vpop.permute.xlu0 %76
    %78 = vrot.lane.b32.xlu0 %v52, 16
    %v79 = vpop.permute.xlu0 %78
    %vm80 = vcmp.lt.s32.totalorder %v58, 16
    %v81 = vsel %vm80, %v77, %v79
    %v82 = vsel %vm80, %v79, %v77
    %s83 = scalar_lea.vmem [#allocation7], 1
    %v84 = vld [vmem:[%s83] ss:$8 sm:$0x3]
    %v86 = vlaneseq
    %v87 = vshrl.u32 %v86, 7
    %v88 = vsub.s32 0, %v87
    %v89 = vrot.slane %v84, %v88
    %v90 = vlaneseq
    %v91 = vshrl.u32 %v90, 7
    %v92 = vsub.s32 1, %v91
    %v93 = vrot.slane %v84, %v92
    %v96 = vmul.f32 %v82, %v89
    %v97 = vmul.f32 %v81, %v93
    %98 = vrot.lane.b32.xlu0 %v51, 15
    %v99 = vpop.permute.xlu0 %98
    %100 = vrot.lane.b32.xlu0 %v52, 15
    %v101 = vpop.permute.xlu0 %100
    %vm102 = vcmp.lt.s32.totalorder %v58, 15
    %v103 = vsel %vm102, %v99, %v101
    %v104 = vsel %vm102, %v101, %v99
    %s105 = scalar_lea.vmem [#allocation7], 2
    %v106 = vld [vmem:[%s105] ss:$8 sm:$0x3]
    %v108 = vlaneseq
    %v109 = vshrl.u32 %v108, 7
    %v110 = vsub.s32 0, %v109
    %v111 = vrot.slane %v106, %v110
    %v112 = vlaneseq
    %v113 = vshrl.u32 %v112, 7
    %v114 = vsub.s32 1, %v113
    %v115 = vrot.slane %v106, %v114
    %v118 = vmul.f32 %v104, %v111
    %v119 = vmul.f32 %v103, %v115
    %120 = vrot.lane.b32.xlu0 %v51, 1
    %v121 = vpop.permute.xlu0 %120
    %122 = vrot.lane.b32.xlu0 %v52, 1
    %v123 = vpop.permute.xlu0 %122
    %vm124 = vcmp.lt.s32.totalorder %v58, 1
    %v125 = vsel %vm124, %v121, %v123
    %v126 = vsel %vm124, %v123, %v121
    %s127 = scalar_lea.vmem [#allocation7], 3
    %v128 = vld [vmem:[%s127] ss:$8 sm:$0x3]
    %v130 = vlaneseq
    %v131 = vshrl.u32 %v130, 7
    %v132 = vsub.s32 0, %v131
    %v133 = vrot.slane %v128, %v132
    %v134 = vlaneseq
    %v135 = vshrl.u32 %v134, 7
    %v136 = vsub.s32 1, %v135
    %v137 = vrot.slane %v128, %v136
    %v140 = vmul.f32 %v126, %v133
    %v141 = vmul.f32 %v125, %v137
    %142 = vrot.lane.b32.xlu0 %v51, 127
    %v143 = vpop.permute.xlu0 %142
    %144 = vrot.lane.b32.xlu0 %v52, 127
    %v145 = vpop.permute.xlu0 %144
    %vm146 = vcmp.lt.s32.totalorder %v58, 127
    %v147 = vsel %vm146, %v143, %v145
    %v148 = vsel %vm146, %v145, %v143
    %s149 = scalar_lea.vmem [#allocation7], 5
    %v150 = vld [vmem:[%s149] ss:$8 sm:$0x3]
    %v152 = vlaneseq
    %v153 = vshrl.u32 %v152, 7
    %v154 = vsub.s32 0, %v153
    %v155 = vrot.slane %v150, %v154
    %v156 = vlaneseq
    %v157 = vshrl.u32 %v156, 7
    %v158 = vsub.s32 1, %v157
    %v159 = vrot.slane %v150, %v158
    %v162 = vmul.f32 %v147, %v155
    %v163 = vmul.f32 %v148, %v159
    %164 = vrot.lane.b32.xlu0 %v51, 113
    %v165 = vpop.permute.xlu0 %164
    %166 = vrot.lane.b32.xlu0 %v52, 113
    %v167 = vpop.permute.xlu0 %166
    %vm168 = vcmp.lt.s32.totalorder %v58, 113
    %v169 = vsel %vm168, %v165, %v167
    %v170 = vsel %vm168, %v167, %v165
    %s171 = scalar_lea.vmem [#allocation7], 6
    %v172 = vld [vmem:[%s171] ss:$8 sm:$0x3]
    %v174 = vlaneseq
    %v175 = vshrl.u32 %v174, 7
    %v176 = vsub.s32 0, %v175
    %v177 = vrot.slane %v172, %v176
    %v178 = vlaneseq
    %v179 = vshrl.u32 %v178, 7
    %v180 = vsub.s32 1, %v179
    %v181 = vrot.slane %v172, %v180
    %v184 = vmul.f32 %v169, %v177
    %v185 = vmul.f32 %v170, %v181
    %186 = vrot.lane.b32.xlu0 %v51, 112
    %v187 = vpop.permute.xlu0 %186
    %188 = vrot.lane.b32.xlu0 %v52, 112
    %v189 = vpop.permute.xlu0 %188
    %vm190 = vcmp.lt.s32.totalorder %v58, 112
    %v191 = vsel %vm190, %v187, %v189
    %v192 = vsel %vm190, %v189, %v187
    %s193 = scalar_lea.vmem [#allocation7], 7
    %v194 = vld [vmem:[%s193] ss:$8 sm:$0x3]
    %v196 = vlaneseq
    %v197 = vshrl.u32 %v196, 7
    %v198 = vsub.s32 0, %v197
    %v199 = vrot.slane %v194, %v198
    %v200 = vlaneseq
    %v201 = vshrl.u32 %v200, 7
    %v202 = vsub.s32 1, %v201
    %v203 = vrot.slane %v194, %v202
    %v206 = vmul.f32 %v191, %v199
    %v207 = vmul.f32 %v192, %v203
    %208 = vrot.lane.b32.xlu0 %v51, 111
    %v209 = vpop.permute.xlu0 %208
    %210 = vrot.lane.b32.xlu0 %v52, 111
    %v211 = vpop.permute.xlu0 %210
    %vm212 = vcmp.lt.s32.totalorder %v58, 111
    %v213 = vsel %vm212, %v209, %v211
    %v214 = vsel %vm212, %v211, %v209
    %s215 = scalar_lea.vmem [#allocation7], 16
    %v216 = vld [vmem:[%s215] ss:$8 sm:$0x3]
    %v218 = vlaneseq
    %v219 = vshrl.u32 %v218, 7
    %v220 = vsub.s32 0, %v219
    %v221 = vrot.slane %v216, %v220
    %v222 = vlaneseq
    %v223 = vshrl.u32 %v222, 7
    %v224 = vsub.s32 1, %v223
    %v225 = vrot.slane %v216, %v224
    %v228 = vmul.f32 %v213, %v221
    %v229 = vmul.f32 %v214, %v225
    %v230 = vld [vmem:[#allocation5] sm:$0xff]
    %v231 = vld [vmem:[%s2] sm:$0xff]
    %233 = vset.pattern.permute.xlu0 0
    %234 = vperm.xlu0 %233, %v231
    %v235 = vpop.permute.xlu0 %234
    %vm237 = vcmask 588800
    %v239 = vsel %vm237, %v230, 0
    %241 = vmatprep.subr.mxu0 %v75
    %242 = vmatpush1.msra.mxu0 %v74
    %243 = vmatprep.subr.mxu0 %v97
    %244 = vmatpush1.msra.mxu0 %v96
    %245 = vmatprep.subr.mxu0 %v119
    %246 = vmatpush1.msra.mxu0 %v118
    %247 = vmatprep.subr.mxu0 %v141
    %248 = vmatpush1.msra.mxu0 %v140
    %249 = vmatprep.subr.mxu0 %v52
    %250 = vmatpush1.msra.mxu0 %v51
    %251 = vmatprep.subr.mxu0 %v163
    %252 = vmatpush1.msra.mxu0 %v162
    %253 = vmatprep.subr.mxu0 %v185
    %254 = vmatpush1.msra.mxu0 %v184
    %255 = vmatprep.subr.mxu0 %v207
    %256 = vmatpush1.msra.mxu0 %v206
    %257 = vmatprep.subr.mxu0 %v229
    %258 = vmatpush1.msra.mxu0 %v228
    %259 = vmatprep.subr.mxu0 0.0
    %260 = vmatpush1.msra.mxu0 0.0
    %261 = vmatprep.subr.mxu0 0.0
    %262 = vmatpush1.msra.mxu0 0.0
    %263 = vmatprep.subr.mxu0 0.0
    %264 = vmatpush1.msra.mxu0 0.0
    %265 = vmatprep.subr.mxu0 0.0
    %266 = vmatpush1.msra.mxu0 0.0
    %267 = vmatprep.subr.mxu0 0.0
    %268 = vmatpush1.msra.mxu0 0.0
    %269 = vmatprep.subr.mxu0 0.0
    %270 = vmatpush1.msra.mxu0 0.0
    %271 = vmatprep.subr.mxu0 0.0
    %272 = vmatpush1.msra.mxu0 0.0
    %273 = vmatprep.subr.mxu0 0.0
    %274 = vmatpush1.msra.mxu0 0.0
    %275 = vmatprep.subr.mxu0 0.0
    %276 = vmatpush1.msra.mxu0 0.0
    %277 = vmatprep.subr.mxu0 0.0
    %278 = vmatpush1.msra.mxu0 0.0
    %279 = vmatprep.subr.mxu0 0.0
    %280 = vmatpush1.msra.mxu0 0.0
    %281 = vmatprep.subr.mxu0 0.0
    %282 = vmatpush1.msra.mxu0 0.0
    %283 = vmatprep.subr.mxu0 0.0
    %284 = vmatpush1.msra.mxu0 0.0
    %285 = vmatprep.subr.mxu0 0.0
    %286 = vmatpush1.msra.mxu0 0.0
    %287 = vmatprep.subr.mxu0 0.0
    %288 = vmatpush1.msra.mxu0 0.0
    %289 = vmatprep.subr.mxu0 0.0
    %290 = vmatpush1.msra.mxu0 0.0
    %291 = vmatprep.subr.mxu0 0.0
    %292 = vmatpush1.msra.mxu0 0.0
    %293 = vmatprep.subr.mxu0 0.0
    %294 = vmatpush1.msra.mxu0 0.0
    %295 = vmatprep.subr.mxu0 0.0
    %296 = vmatpush1.msra.mxu0 0.0
    %297 = vmatprep.subr.mxu0 0.0
    %298 = vmatpush1.msra.mxu0 0.0
    %299 = vmatprep.subr.mxu0 0.0
    %300 = vmatpush1.msra.mxu0 0.0
    %301 = vmatprep.subr.mxu0 0.0
    %302 = vmatpush1.msra.mxu0 0.0
    %303 = vmatprep.subr.mxu0 0.0
    %304 = vmatpush1.msra.mxu0 0.0
    %305 = vmatprep.mubr.f32.mxu0 0.0
    %306 = vmatmul.mubr.f32.gmra.mrb[0].mxu0 %v239
    %v307 = vpop.f32.mrb[0].mxu0
    %v308 = vadd.f32 %v235, %v307
    %v309 = vpop.f32.mrb[0].mxu0
    %v310 = vadd.f32 %v235, %v309
    %311 = vdwg.mxu0
    %p312 = scmp.eq.s32.totalorder 0, 0
    // Predicated region
    $region34: #{tpu_custom_call.1} parent=1 // pred_check
      %p313 = pneg %p312
    $region35: #{tpu_custom_call.1} parent=1 // pred_check_branch
      %315 = sbr.rel (%p313) target = $region37
    $region36: #{tpu_custom_call.1} parent=1 // pred_region
      %v316 = vadd.f32 %v308, %v310
      %317 = vadd.xlane.f32.xlu0 %v316
      %v318 = vpop.xlane.xlu0 %317
      %v319 = vrcp.pop 256.0
      %v320 = vmul.f32 %v318, %v319
      %v322 = vrot.slane %v320, 4
      %v324 = vadd.f32 %v320, %v322
      %v325 = vmul.f32 %v324, 0.5
      %v327 = vrot.slane %v325, 4
      %vm329 = vcmask 1043456
      %v330 = vsel %vm329, %v325, %v327
      %vm331 = vcmask 7168
      %332 = vst.msk [vmem:[#allocation2] sm:$0xff] %vm331, %v330
      %333 = vst.msk [vmem:[#allocation3] sm:$0xff] %vm331, 0.0
      %334 = vst.msk [vmem:[#allocation4] sm:$0xff] %vm331, 0.0
      %vm335 = vcmask 3072
      %336 = vst.msk [vmem:[%s6] sm:$0xf] %vm335, 0.0
      %337 = vst.msk [vmem:[%s7] sm:$0xf] %vm335, 0.0
    $region37: #{tpu_custom_call.1} parent=1 // pred_fallthru
      _
    %v338 = vld [vmem:[#allocation2] sm:$0xff]
    %340 = vset.pattern.permute.xlu0 0
    %341 = vperm.xlu0 %340, %v338
    %v342 = vpop.permute.xlu0 %341
    %v344 = vsub.f32 %v308, %v342
    %v345 = vsub.f32 %v310, %v342
    %v346 = vld [vmem:[#allocation3] sm:$0xff]
    %v347 = vadd.f32 %v344, %v345
    %348 = vadd.xlane.f32.xlu0 %v347
    %v349 = vpop.xlane.xlu0 %348
    %v350 = vadd.f32 %v346, %v349
    %vm351 = vcmask 7168
    %352 = vst.msk [vmem:[#allocation3] sm:$0xff] %vm351, %v350
    %v353 = vld [vmem:[#allocation4] sm:$0xff]
    %v354 = vmul.f32 %v344, %v344
    %v355 = vmul.f32 %v345, %v345
    %v356 = vadd.f32 %v354, %v355
    %357 = vadd.xlane.f32.xlu0 %v356
    %v358 = vpop.xlane.xlu0 %357
    %v359 = vadd.f32 %v353, %v358
    %360 = vst.msk [vmem:[#allocation4] sm:$0xff] %vm351, %v359
    // Predicated region
    $region38: #{tpu_custom_call.1} parent=1 // pred_check
      %p361 = pneg %p312
    $region39: #{tpu_custom_call.1} parent=1 // pred_check_branch
      %363 = sbr.rel (%p361) target = $region41
    $region40: #{tpu_custom_call.1} parent=1 // pred_region
      %v364 = vld [vmem:[#allocation3] sm:$0xff]
      %v365 = vld [vmem:[#allocation4] sm:$0xff]
      %v367 = vrot.slane %v364, 4
      %v369 = vadd.f32 %v364, %v367
      %v371 = vrot.slane %v365, 4
      %v373 = vadd.f32 %v365, %v371
      %v374 = vmul.f32 %v369, 0.001953125
      %v375 = vld [vmem:[#allocation2] sm:$0xf]
      %v376 = vadd.f32 %v375, %v374
      %v377 = vmul.f32 %v373, 0.001953125
      %v378 = vmul.f32 %v374, %v374
      %v379 = vsub.f32 %v377, %v378
      %v380 = vmax.f32 %v379, 0.0
      %v381 = vld [vmem:[%s4] sm:$0xf]
      %v382 = vadd.f32 %v380, 1e-05
      %v383 = vrsqrt.pop %v382
      %v384 = vmul.f32 %v381, %v383
      %vm385 = vcmask 3072
      %386 = vst.msk [vmem:[%s6] sm:$0xf] %vm385, %v384
      %v387 = vld [vmem:[%s5] sm:$0xf]
      %v388 = vmul.f32 %v376, %v384
      %v389 = vsub.f32 %v387, %v388
      %390 = vst.msk [vmem:[%s7] sm:$0xf] %vm385, %v389
    $region41: #{tpu_custom_call.1} parent=1 // pred_fallthru
      _
    // Predicated region
    $region42: #{tpu_custom_call.1} parent=1 // pred_check
      _
    $region43: #{tpu_custom_call.1} parent=1 // pred_check_branch
      %392 = sbr.rel (0) target = $region45
    $region44: #{tpu_custom_call.1} parent=1 // pred_region
      _
    $region45: #{tpu_custom_call.1} parent=1 // pred_fallthru
      _
    // Predicated region
    $region46: #{tpu_custom_call.1} parent=1 // pred_check
      _
    $region47: #{tpu_custom_call.1} parent=1 // pred_check_branch
      %394 = sbr.rel (0) target = $region49
    $region48: #{tpu_custom_call.1} parent=1 // pred_region
      _
    $region49: #{tpu_custom_call.1} parent=1 // pred_fallthru
      _
    // Predicated region
    $region50: #{tpu_custom_call.1} parent=1 // pred_check
      _
    $region51: #{tpu_custom_call.1} parent=1 // pred_check_branch
      %396 = sbr.rel (0) target = $region53
    $region52: #{tpu_custom_call.1} parent=1 // pred_region
      _
    $region53: #{tpu_custom_call.1} parent=1 // pred_fallthru
      _
    // Predicated region
    $region54: #{tpu_custom_call.1} parent=1 // pred_check
      _
    $region55: #{tpu_custom_call.1} parent=1 // pred_check_branch
      %398 = sbr.rel (0) target = $region57
    $region56: #{tpu_custom_call.1} parent=1 // pred_region
      _
    $region57: #{tpu_custom_call.1} parent=1 // pred_fallthru
      _
    %399 = vsyncpa [#allocation6], 1
    %400 = vsyncpa [#allocation8], 1

</llo_original>
